<compile_context>
chip_gen: v7x
topology: tpu7x:2x2x1
jax: 0.10.0
libtpu: 0.0.40
codegen_flags: <defaults>
</compile_context>

<pallas_src>
import numpy as np
import jax
import jax.numpy as jnp
from jax import lax
from jax.experimental import pallas as pl
from jax.experimental.pallas import tpu as pltpu

EPS = 1e-12                       # F.normalize default eps
_K_TILE = 1024                    # contraction tile for the streaming matmuls
_VMEM_LIMIT = 32 * 1024 * 1024    # explicit scoped-VMEM budget (fits v5e/v6e/v7x)


def _round_up(n, m):
    return ((n + m - 1) // m) * m


def _pad_to(x, axis, target):
    pad = target - x.shape[axis]
    if pad <= 0:
        return x
    widths = [(0, 0)] * x.ndim
    widths[axis] = (0, pad)
    return jnp.pad(x, widths)


def _linear_kp(k):
    """Padded contraction length and K tile used by the streaming linear kernels."""
    kp = _round_up(k, 128)
    tk = min(_K_TILE, kp)
    return _round_up(kp, tk), tk


# ---------------------------------------------------------------------------
# Kernel 1: tiled matmul  y = x @ W + b, optional fused row-wise L2 normalize.
#   W is streamed in bf16; x is cast to bf16 at the dot; accumulation is f32.
# ---------------------------------------------------------------------------
def _make_linear_kernel(normalize):
    def kernel(x_ref, w_ref, b_ref, o_ref, acc_ref):
        k = pl.program_id(0)

        @pl.when(k == 0)
        def _():
            acc_ref[...] = jnp.zeros_like(acc_ref)

        acc_ref[...] += jnp.dot(x_ref[...].astype(jnp.bfloat16), w_ref[...],
                                preferred_element_type=jnp.float32)

        @pl.when(k == pl.num_programs(0) - 1)
        def _():
            y = acc_ref[...] + b_ref[...]
            if normalize:
                sq = jnp.sum(y * y, axis=1, keepdims=True)
                # == y / max(||y||, eps)  (F.normalize), but a single EUP rsqrt.
                y = y * lax.rsqrt(jnp.maximum(sq, EPS * EPS))
            o_ref[...] = y.astype(o_ref.dtype)

    return kernel


# TODO(synk): give the normalize=True projections a parallel N-split (two-pass
# row-L2 reduction) so v7x can use both TensorCores on this stage as well.
def linear_pallas(x, w, b=None, *, normalize=False):
    """x: (B, K) f32, w: (K or Kp, N) bf16 (torch weight.T), b: (N,) f32."""
    B, K = x.shape
    N = w.shape[1]
    if b is None:
        b = jnp.zeros((N,), jnp.float32)

    Kp, tk = _linear_kp(K)
    if w.shape[0] != Kp:              # no-op when weights are pre-padded
        w = _pad_to(w, 0, Kp)
    if K != Kp:                       # zero-pad contraction dim (exact)
        x = _pad_to(x, 1, Kp)
    b2 = b.reshape(1, N)

    return pl.pallas_call(
        _make_linear_kernel(normalize),
        out_shape=jax.ShapeDtypeStruct((B, N), jnp.float32),
        grid_spec=pltpu.PrefetchScalarGridSpec(
            num_scalar_prefetch=0,
            grid=(Kp // tk,),
            in_specs=[
                pl.BlockSpec((B, tk), lambda k: (0, k)),
                pl.BlockSpec((tk, N), lambda k: (k, 0)),
                pl.BlockSpec((1, N), lambda k: (0, 0)),
            ],
            out_specs=pl.BlockSpec((B, N), lambda k: (0, 0)),
            scratch_shapes=[pltpu.VMEM((B, N), jnp.float32)],
        ),
        compiler_params=pltpu.CompilerParams(
            dimension_semantics=("arbitrary",),
            vmem_limit_bytes=_VMEM_LIMIT),
    )(x, w, b2)


# ---------------------------------------------------------------------------
# Kernel 2: batched (grouped) matmul  y[g] = x[g] @ w[g]   (no bias).
#   Used to fuse the four grid-invariant fc1 hoist matmuls into two calls;
#   the group axis is "parallel" (feeds both TensorCores on v7x).
# ---------------------------------------------------------------------------
def _batched_linear_kernel(x_ref, w_ref, o_ref, acc_ref):
    k = pl.program_id(1)

    @pl.when(k == 0)
    def _():
        acc_ref[...] = jnp.zeros_like(acc_ref)

    acc_ref[...] += jnp.dot(x_ref[...].astype(jnp.bfloat16), w_ref[...],
                            preferred_element_type=jnp.float32)

    @pl.when(k == pl.num_programs(1) - 1)
    def _():
        o_ref[...] = acc_ref[...].astype(o_ref.dtype)


def batched_linear_pallas(x, w):
    """x: (G, B, K) f32, w: (G, K, N) bf16 -> (G, B, N) f32."""
    G, B, K = x.shape
    N = w.shape[2]
    Kp, tk = _linear_kp(K)
    if K != Kp:
        x = _pad_to(x, 2, Kp)
    if w.shape[1] != Kp:
        w = _pad_to(w, 1, Kp)

    return pl.pallas_call(
        _batched_linear_kernel,
        out_shape=jax.ShapeDtypeStruct((G, B, N), jnp.float32),
        grid_spec=pltpu.PrefetchScalarGridSpec(
            num_scalar_prefetch=0,
            grid=(G, Kp // tk),
            in_specs=[
                pl.BlockSpec((None, B, tk), lambda g, k: (g, 0, k)),
                pl.BlockSpec((None, tk, N), lambda g, k: (g, k, 0)),
            ],
            out_specs=pl.BlockSpec((None, B, N), lambda g, k: (g, 0, 0)),
            scratch_shapes=[pltpu.VMEM((B, N), jnp.float32)],
        ),
        compiler_params=pltpu.CompilerParams(
            dimension_semantics=("parallel", "arbitrary"),
            vmem_limit_bytes=_VMEM_LIMIT),
    )(x, w)


# ---------------------------------------------------------------------------
# Kernel 3: fused cross_modal_comb + per-pixel L2 normalize + fc1 + ReLU + fc2,
#           grid-invariant fc1 contributions hoisted (vH/sH/aH/pH), sentence
#           rows blocked by TI per grid step, lane-dense (128-wide) output.
# ---------------------------------------------------------------------------
def _mac_head_kernel(v_ref, s_ref, soft_ref, vp_ref,
                     vH_ref, sH_ref, aH_ref, pH_ref,
                     w1mv_ref, w1ma_ref, b1_ref, w2_ref, b2_ref, o_ref):
    v = v_ref[...]          # (B, Sp)   clip features (j axis), L2-normalized
    s = s_ref[...]          # (TI, Sp)  sentence rows of this block (i axis)
    soft = soft_ref[...]    # (B, Ap)
    vp = vp_ref[...]        # (TI, Ap)

    TI, Sp = s.shape
    B = v.shape[0]
    Ap = soft.shape[1]
    Hp = w1mv_ref.shape[1]
    n_out = w2_ref.shape[1]

    bf16 = jnp.bfloat16
    dn = (((1,), (1,)), ((), ()))   # contract last dims: (TI,K) x (B,K) -> (TI,B)

    # ---- vision / sentence cross-modal block ----
    mul_v = (s[:, None, :] * v[None, :, :]).astype(bf16)           # (TI, B, Sp)
    pre_vis = jnp.dot(mul_v.reshape(TI * B, Sp), w1mv_ref[...],
                      preferred_element_type=jnp.float32).reshape(TI, B, Hp)
    pre_vis = pre_vis + vH_ref[...][None, :, :] + sH_ref[...][:, None, :]

    # ||comb||^2 = sum(mul^2) + 2*sum(mul) + 2*(||v||^2 + ||s||^2), all on the MXU.
    v2 = (v * v).astype(bf16)
    s2 = (s * s).astype(bf16)
    ssq = jnp.sum(s * s, axis=1, keepdims=True)                     # (TI, 1)
    vsq = lax.dot_general(jnp.ones((1, Sp), bf16), v2, dn,
                          preferred_element_type=jnp.float32)       # (1, B)
    m2 = lax.dot_general(s2, v2, dn, preferred_element_type=jnp.float32)
    m1 = lax.dot_general(s.astype(bf16), v.astype(bf16), dn,
                         preferred_element_type=jnp.float32)        # (TI, B)
    vis_scale = lax.rsqrt(jnp.maximum(m2 + 2.0 * m1 + 2.0 * (vsq + ssq),
                                      EPS * EPS))                   # (TI, B)

    # ---- action cross-modal block ----
    mul_a = (vp[:, None, :] * soft[None, :, :]).astype(bf16)        # (TI, B, Ap)
    pre_act = jnp.dot(mul_a.reshape(TI * B, Ap), w1ma_ref[...],
                      preferred_element_type=jnp.float32).reshape(TI, B, Hp)
    pre_act = pre_act + aH_ref[...][None, :, :] + pH_ref[...][:, None, :]

    a2 = (soft * soft).astype(bf16)
    p2 = (vp * vp).astype(bf16)
    psq = jnp.sum(vp * vp, axis=1, keepdims=True)                   # (TI, 1)
    asq = lax.dot_general(jnp.ones((1, Ap), bf16), a2, dn,
                          preferred_element_type=jnp.float32)       # (1, B)
    n2 = lax.dot_general(p2, a2, dn, preferred_element_type=jnp.float32)
    n1 = lax.dot_general(vp.astype(bf16), soft.astype(bf16), dn,
                         preferred_element_type=jnp.float32)
    act_scale = lax.rsqrt(jnp.maximum(n2 + 2.0 * n1 + 2.0 * (asq + psq),
                                      EPS * EPS))                   # (TI, B)

    # fc1 (1x1 conv) + ReLU, then fc2 (1x1 conv); lane-dense padded output.
    mid = jnp.maximum(vis_scale[:, :, None] * pre_vis
                      + act_scale[:, :, None] * pre_act
                      + b1_ref[...][None, :, :], 0.0)               # (TI, B, Hp)
    out = (jnp.dot(mid.reshape(TI * B, Hp).astype(bf16), w2_ref[...],
                   preferred_element_type=jnp.float32)
           + b2_ref[...])                                           # (TI*B, n_out)
    o_ref[...] = out.reshape(TI, B, n_out).astype(o_ref.dtype)


def _choose_ti(bi, b, target):
    """Row-block size: multiple of 8 dividing bi, TI*B <= target, grid >= 2 preferred."""
    cands = [d for d in range(8, bi + 1, 8) if bi % d == 0]
    best = None
    for d in cands:                       # ascending -> keep largest that fits
        if d * b <= target and bi // d >= 2:
            best = d
    if best is None:
        for d in cands:
            if d * b <= target:
                best = d
    return best if best is not None else cands[0]


# TODO(synk): for very large batch sizes, block the clip (j) axis as well so the
# (TI, B, Hp) f32 intermediates stay inside the per-step VMEM budget.
def mac_head(v_n, s_n, soft_n, vp_n, vH, sH, aH, pH,
             w1mv, w1ma, b1, w2, b2, *, row_target=256):
    B, Sp = v_n.shape
    Ap = soft_n.shape[1]
    Hp = w1mv.shape[1]
    n_out = w2.shape[1]

    # Pad the sentence/VP row axis to a multiple of 8 so the blocked grid (and the
    # megacore split) works for any B; the extra rows are sliced off below.
    bi = _round_up(B, 8)
    s_n = _pad_to(s_n, 0, bi)
    vp_n = _pad_to(vp_n, 0, bi)
    sH = _pad_to(sH, 0, bi)
    pH = _pad_to(pH, 0, bi)

    ti = _choose_ti(bi, B, row_target)

    b1_2 = b1.reshape(1, Hp)
    b2_2 = b2.reshape(1, n_out)

    def build(single_buffer_consts):
        if single_buffer_consts:
            # Grid-constant inputs: single-buffered (index map is (0,0) every step).
            def const(shape):
                return pl.BlockSpec(shape, lambda i: (0, 0),
                                    pipeline_mode=pl.Buffered(1))
        else:
            def const(shape):
                return pl.BlockSpec(shape, lambda i: (0, 0))

        def rowblk(shape):
            return pl.BlockSpec(shape, lambda i: (i, 0))

        in_specs = [
            const((B, Sp)), rowblk((ti, Sp)), const((B, Ap)), rowblk((ti, Ap)),
            const((B, Hp)), rowblk((ti, Hp)), const((B, Hp)), rowblk((ti, Hp)),
            const((Sp, Hp)), const((Ap, Hp)),
            const((1, Hp)), const((Hp, n_out)), const((1, n_out)),
        ]
        return pl.pallas_call(
            _mac_head_kernel,
            out_shape=jax.ShapeDtypeStruct((bi, B, n_out), jnp.float32),
            grid_spec=pltpu.PrefetchScalarGridSpec(
                num_scalar_prefetch=0,
                grid=(bi // ti,),
                in_specs=in_specs,
                out_specs=pl.BlockSpec((ti, B, n_out), lambda i: (i, 0, 0)),
            ),
            compiler_params=pltpu.CompilerParams(
                dimension_semantics=("parallel",),
                vmem_limit_bytes=_VMEM_LIMIT),
        )

    args = (v_n, s_n, soft_n, vp_n, vH, sH, aH, pH, w1mv, w1ma, b1_2, w2, b2_2)
    try:
        out = build(True)(*args)
    except Exception:
        # Fallback if pl.Buffered(1) single-buffering is unsupported by this jax.
        out = build(False)(*args)
    return out[:B]


# ---------------------------------------------------------------------------
# MAC module: parameters, parameter prep (padding, bf16 casting, weight folding).
# ---------------------------------------------------------------------------
def init_params(key, cfg):
    S = cfg["semantic_size"]
    A = cfg["action_semantic_size"]
    Dv = cfg["visual_feature_dim"]
    Ds = cfg["sentence_embedding_size"]
    Dsoft = cfg["clip_softmax_dim"]
    Dvp = 2 * cfg["spacy_vec_dim"]
    C = 4 * S + 4 * A
    H = cfg["fc1_hidden"]
    ks = jax.random.split(key, 6)
    p = {}
    # nn.Linear: weights_init -> normal(0, 1), bias = 0.  Stored as (in, out).
    p["v2s_w"] = jax.random.normal(ks[0], (Dv, S), jnp.float32)
    p["v2s_b"] = jnp.zeros((S,), jnp.float32)
    p["s2s_w"] = jax.random.normal(ks[1], (Ds, S), jnp.float32)
    p["s2s_b"] = jnp.zeros((S,), jnp.float32)
    p["soft2s_w"] = jax.random.normal(ks[2], (Dsoft, A), jnp.float32)
    p["soft2s_b"] = jnp.zeros((A,), jnp.float32)
    p["VP2s_w"] = jax.random.normal(ks[3], (Dvp, A), jnp.float32)
    p["VP2s_b"] = jnp.zeros((A,), jnp.float32)
    # Conv2d 1x1: weights_init -> normal(0, 0.01), bias = 0.  Stored as (C_in, C_out).
    p["fc1_w"] = 0.01 * jax.random.normal(ks[4], (C, H), jnp.float32)
    p["fc1_b"] = jnp.zeros((H,), jnp.float32)
    p["fc2_w"] = 0.01 * jax.random.normal(ks[5], (H, 3), jnp.float32)
    p["fc2_b"] = jnp.zeros((3,), jnp.float32)
    return p


def prepare_params(params, cfg):
    """Pad feature/hidden dims to multiples of 128 (exact zero padding), fold the
    fc1 weight into per-pixel ('mul') and grid-invariant segments, cast all
    streamed weights to bf16, and pad fc2 to a lane-dense 128-wide output."""
    S = cfg["semantic_size"]
    A = cfg["action_semantic_size"]
    H = cfg["fc1_hidden"]
    Sp, Ap, Hp = _round_up(S, 128), _round_up(A, 128), _round_up(H, 128)
    NOUT = 128  # lane-dense fc2 output (3 real channels + zero pad)
    bf16 = jnp.bfloat16

    def proj_weight(w, n_pad):
        kp, _ = _linear_kp(w.shape[0])
        return _pad_to(_pad_to(w, 0, kp), 1, n_pad).astype(bf16)

    p = {}
    p["v2s_w"] = proj_weight(params["v2s_w"], Sp)
    p["v2s_b"] = _pad_to(params["v2s_b"], 0, Sp)
    p["s2s_w"] = proj_weight(params["s2s_w"], Sp)
    p["s2s_b"] = _pad_to(params["s2s_b"], 0, Sp)
    p["soft2s_w"] = proj_weight(params["soft2s_w"], Ap)
    p["soft2s_b"] = _pad_to(params["soft2s_b"], 0, Ap)
    p["VP2s_w"] = proj_weight(params["VP2s_w"], Ap)
    p["VP2s_b"] = _pad_to(params["VP2s_b"], 0, Ap)

    # fc1 channel order (torch concat): [mul_v, add_v, vv, ss, mul_a, add_a, soft, vp]
    segs = np.cumsum([S, S, S, S, A, A, A, A])[:-1].tolist()
    w_mv, w_av, w_vv, w_ss, w_ma, w_aa, w_sv, w_vp = jnp.split(
        params["fc1_w"], segs, axis=0)

    def prep_w(wseg, in_pad):
        return _pad_to(_pad_to(wseg, 0, in_pad), 1, Hp)

    p["w1_mv"] = prep_w(w_mv, Sp).astype(bf16)      # per-pixel (v_j * s_i) weight
    p["w1_ma"] = prep_w(w_ma, Ap).astype(bf16)      # per-pixel (soft_j * vp_i) weight
    # grid-invariant fc1 contributions, stacked for the fused batched hoist matmuls
    p["w1_vs_h"] = jnp.stack([prep_w(w_av + w_vv, Sp),     # clip side (vH)
                              prep_w(w_av + w_ss, Sp)]     # sentence side (sH)
                             ).astype(bf16)                 # (2, Sp, Hp)
    p["w1_ap_h"] = jnp.stack([prep_w(w_aa + w_sv, Ap),     # softmax side (aH)
                              prep_w(w_aa + w_vp, Ap)]     # VP side (pH)
                             ).astype(bf16)                 # (2, Ap, Hp)
    p["fc1_b"] = _pad_to(params["fc1_b"], 0, Hp)
    p["fc2_w"] = _pad_to(_pad_to(params["fc2_w"], 0, Hp), 1, NOUT).astype(bf16)
    p["fc2_b"] = _pad_to(params["fc2_b"], 0, NOUT)
    return p


def mac_forward(prep, visual, sentence, softmax, vp_embed):
    # projections + row L2 normalize (F.normalize), bf16 weight streaming
    v_n = linear_pallas(visual, prep["v2s_w"], prep["v2s_b"], normalize=True)
    s_n = linear_pallas(sentence, prep["s2s_w"], prep["s2s_b"], normalize=True)
    soft_n = linear_pallas(softmax, prep["soft2s_w"], prep["soft2s_b"], normalize=True)
    vp_n = linear_pallas(vp_embed, prep["VP2s_w"], prep["VP2s_b"], normalize=True)

    # hoisted grid-invariant fc1 contributions: 2 fused batched matmul calls
    vs_h = batched_linear_pallas(jnp.stack([v_n, s_n]), prep["w1_vs_h"])     # (2,B,Hp)
    ap_h = batched_linear_pallas(jnp.stack([soft_n, vp_n]), prep["w1_ap_h"])  # (2,B,Hp)

    out_ij = mac_head(v_n, s_n, soft_n, vp_n,
                      vs_h[0], vs_h[1], ap_h[0], ap_h[1],
                      prep["w1_mv"], prep["w1_ma"],
                      prep["fc1_b"], prep["fc2_w"], prep["fc2_b"])
    # match torch: conv output [1, 3, B, B].squeeze(0) -> [3, B_i, B_j]
    return jnp.transpose(out_ij[:, :, :3], (2, 0, 1))


# ---------------------------------------------------------------------------
# Pure-JAX reference (mirrors the PyTorch forward literally) for validation.
# ---------------------------------------------------------------------------
def mac_reference(params, visual, sentence, softmax, vp_embed):
    def lin_norm(x, w, b):
        y = x @ w + b
        n = jnp.sqrt(jnp.sum(y * y, axis=1, keepdims=True))
        return y / jnp.maximum(n, EPS)

    v_n = lin_norm(visual, params["v2s_w"], params["v2s_b"])
    s_n = lin_norm(sentence, params["s2s_w"], params["s2s_b"])
    soft_n = lin_norm(softmax, params["soft2s_w"], params["soft2s_b"])
    vp_n = lin_norm(vp_embed, params["VP2s_w"], params["VP2s_b"])

    def comb(vf, se):
        B, size = vf.shape
        vv = jnp.broadcast_to(vf[None, :, :], (B, B, size))   # vv[i,j] = vf[j]
        ss = jnp.broadcast_to(se[:, None, :], (B, B, size))   # ss[i,j] = se[i]
        return jnp.concatenate([vv * ss, vv + ss, vv, ss], axis=2)

    def norm2(x):
        n = jnp.sqrt(jnp.sum(x * x, axis=2, keepdims=True))
        return x / jnp.maximum(n, EPS)

    feat = jnp.concatenate([norm2(comb(v_n, s_n)), norm2(comb(soft_n, vp_n))],
                           axis=2)                            # (B, B, C)
    mid = jnp.maximum(jnp.einsum("ijc,ch->ijh", feat, params["fc1_w"])
                      + params["fc1_b"], 0.0)
    out = jnp.einsum("ijh,hk->ijk", mid, params["fc2_w"]) + params["fc2_b"]
    return jnp.transpose(out, (2, 0, 1))


if __name__ == "__main__":
    # Scaled-down configuration (same structure as the real MAC module;
    # real: S=1024, Ds=4800, Dv=12288, Dsoft=400, spacy=300, A=300, H=1000).
    cfg = dict(
        semantic_size=128,
        sentence_embedding_size=480,
        visual_feature_dim=1536,      # exercises multi-step K accumulation
        clip_softmax_dim=200,
        spacy_vec_dim=64,
        action_semantic_size=96,      # exercises 128-padding of A
        fc1_hidden=120,               # exercises 128-padding of H
    )
    B = 12                            # B % 8 != 0 -> exercises row padding + 2-step grid

    key = jax.random.PRNGKey(0)
    kp, kv, ks, ksm, kvp = jax.random.split(key, 5)
    params = init_params(kp, cfg)
    prep = prepare_params(params, cfg)

    visual = jax.random.normal(kv, (B, cfg["visual_feature_dim"]), jnp.float32)
    sentence = jax.random.normal(ks, (B, cfg["sentence_embedding_size"]), jnp.float32)
    softmax = jax.random.normal(ksm, (B, cfg["clip_softmax_dim"]), jnp.float32)
    vp_embed = jax.random.normal(kvp, (B, 2 * cfg["spacy_vec_dim"]), jnp.float32)

    out = jax.block_until_ready(mac_forward(prep, visual, sentence, softmax, vp_embed))
    ref = jax.block_until_ready(mac_reference(params, visual, sentence, softmax, vp_embed))

    assert out.shape == (3, B, B), out.shape
    err = float(jnp.max(jnp.abs(out - ref)))
    scale = float(jnp.max(jnp.abs(ref))) + 1e-6
    assert err <= 5e-2 * scale + 1e-6, f"mismatch: err={err}, scale={scale}"
    print("KERNEL_OK")
</pallas_src>

<mosaic_0001>
module attributes {stable_mosaic.version = 11 : i64} {
  func.func @kernel(%arg0: i32, %arg1: memref<12x1024xf32, #tpu.memory_space<vmem>>, %arg2: memref<1024x128xbf16, #tpu.memory_space<vmem>>, %arg3: memref<1x128xf32, #tpu.memory_space<vmem>>, %arg4: memref<12x128xf32, #tpu.memory_space<vmem>>, %arg5: memref<12x128xf32, #tpu.memory_space<vmem>>) attributes {dimension_semantics = [#tpu.dimension_semantics<arbitrary>], iteration_bounds = array<i64: 2>, scalar_prefetch = 0 : i64, scratch_operands = 1 : i64, tpu.core_type = #tpu.core_type<tc>, window_params = [{transform_indices = @transform_0, window_bounds = array<i64: 12, 1024>}, {transform_indices = @transform_1, window_bounds = array<i64: 1024, 128>}, {pipeline_mode = #tpu.pipeline_mode<synchronous>, transform_indices = @transform_2, window_bounds = array<i64: 1, 128>}, {pipeline_mode = #tpu.pipeline_mode<synchronous>, transform_indices = @transform_3, window_bounds = array<i64: 12, 128>}]} {
    %c0_i32 = arith.constant 0 : i32
    %0 = arith.cmpi eq, %arg0, %c0_i32 : i32
    %1 = arith.extui %0 : i1 to i32
    %c0_i32_0 = arith.constant 0 : i32
    %2 = arith.cmpi ne, %1, %c0_i32_0 : i32
    scf.if %2 {
      %cst_9 = arith.constant 0.000000e+00 : f32
      %13 = vector.broadcast %cst_9 : f32 to vector<12x128xf32>
      %c0_10 = arith.constant 0 : index
      %c0_11 = arith.constant 0 : index
      %14 = vector.load %arg5[%c0_10, %c0_11] : memref<12x128xf32, #tpu.memory_space<vmem>>, vector<12x128xf32>
      tpu.vector_store %arg5[%c0_10, %c0_11], %13 {strides = array<i32>} : memref<12x128xf32, #tpu.memory_space<vmem>>, vector<12x128xf32>,
    } else {
    }
    %c0 = arith.constant 0 : index
    %c0_1 = arith.constant 0 : index
    %3 = vector.load %arg5[%c0, %c0_1] : memref<12x128xf32, #tpu.memory_space<vmem>>, vector<12x128xf32>
    %c0_2 = arith.constant 0 : index
    %c0_3 = arith.constant 0 : index
    %4 = vector.load %arg1[%c0_2, %c0_3] : memref<12x1024xf32, #tpu.memory_space<vmem>>, vector<12x1024xf32>
    %5 = arith.truncf %4 : vector<12x1024xf32> to vector<12x1024xbf16>
    %c0_4 = arith.constant 0 : index
    %c0_5 = arith.constant 0 : index
    %6 = vector.load %arg2[%c0_4, %c0_5] : memref<1024x128xbf16, #tpu.memory_space<vmem>>, vector<1024x128xbf16>
    %cst = arith.constant dense<0.000000e+00> : vector<12x128xf32>
    %7 = tpu.matmul %5, %6, %cst {dimension_numbers = #tpu.dot_dimension_numbers<[1], [0], [0], [1], [0, 0, 1, 1], [], []>} : vector<12x1024xbf16>, vector<1024x128xbf16>, vector<12x128xf32> -> vector<12x128xf32>
    %8 = arith.addf %3, %7 : vector<12x128xf32>
    %c0_6 = arith.constant 0 : index
    %c0_7 = arith.constant 0 : index
    %9 = vector.load %arg5[%c0_6, %c0_7] : memref<12x128xf32, #tpu.memory_space<vmem>>, vector<12x128xf32>
    tpu.vector_store %arg5[%c0_6, %c0_7], %8 {strides = array<i32>} : memref<12x128xf32, #tpu.memory_space<vmem>>, vector<12x128xf32>,
    %c1_i32 = arith.constant 1 : i32
    %10 = arith.cmpi eq, %arg0, %c1_i32 : i32
    %11 = arith.extui %10 : i1 to i32
    %c0_i32_8 = arith.constant 0 : i32
    %12 = arith.cmpi ne, %11, %c0_i32_8 : i32
    scf.if %12 {
      %c0_9 = arith.constant 0 : index
      %c0_10 = arith.constant 0 : index
      %13 = vector.load %arg5[%c0_9, %c0_10] : memref<12x128xf32, #tpu.memory_space<vmem>>, vector<12x128xf32>
      %c0_11 = arith.constant 0 : index
      %c0_12 = arith.constant 0 : index
      %14 = vector.load %arg3[%c0_11, %c0_12] : memref<1x128xf32, #tpu.memory_space<vmem>>, vector<1x128xf32>
      %15 = vector.broadcast %14 : vector<1x128xf32> to vector<12x128xf32>
      %16 = arith.addf %13, %15 : vector<12x128xf32>
      %17 = arith.mulf %16, %16 : vector<12x128xf32>
      %cst_13 = arith.constant dense<0.000000e+00> : vector<12xf32>
      %18 = vector.multi_reduction <add>, %17, %cst_13 [1] : vector<12x128xf32> to vector<12xf32>
      %19 = vector.shape_cast %18 : vector<12xf32> to vector<12x1xf32>
      %cst_14 = arith.constant 1.000000e-24 : f32
      %20 = vector.broadcast %cst_14 : f32 to vector<12x1xf32>
      %21 = arith.maximumf %19, %20 : vector<12x1xf32>
      %22 = math.rsqrt %21 : vector<12x1xf32>
      %23 = vector.broadcast %22 : vector<12x1xf32> to vector<12x128xf32>
      %24 = arith.mulf %16, %23 : vector<12x128xf32>
      %c0_15 = arith.constant 0 : index
      %c0_16 = arith.constant 0 : index
      %25 = vector.load %arg4[%c0_15, %c0_16] : memref<12x128xf32, #tpu.memory_space<vmem>>, vector<12x128xf32>
      tpu.vector_store %arg4[%c0_15, %c0_16], %24 {strides = array<i32>} : memref<12x128xf32, #tpu.memory_space<vmem>>, vector<12x128xf32>,
    } else {
    }
    return
  }
  func.func @transform_0(%arg0: i32) -> (i32, i32) {
    %c0_i32 = arith.constant 0 : i32
    %c0_i32_0 = arith.constant 0 : i32
    return %c0_i32, %arg0 : i32, i32
  }
  func.func @transform_1(%arg0: i32) -> (i32, i32) {
    %c0_i32 = arith.constant 0 : i32
    %c0_i32_0 = arith.constant 0 : i32
    return %arg0, %c0_i32 : i32, i32
  }
  func.func @transform_2(%arg0: i32) -> (i32, i32) {
    %c0_i32 = arith.constant 0 : i32
    %c0_i32_0 = arith.constant 0 : i32
    %c0_i32_1 = arith.constant 0 : i32
    return %c0_i32, %c0_i32_0 : i32, i32
  }
  func.func @transform_3(%arg0: i32) -> (i32, i32) {
    %c0_i32 = arith.constant 0 : i32
    %c0_i32_0 = arith.constant 0 : i32
    %c0_i32_1 = arith.constant 0 : i32
    return %c0_i32, %c0_i32_0 : i32, i32
  }
}

</mosaic_0001>

<llo_original>
// kernel: tpu_custom_call.1
$region0: #{tpu_custom_call.1}
  #allocation0 [shape = 'u32[]', space=smem, size = 0x4, offset = 0x4, fixed_abs, tag = 'smem constant byte address 0x4 - core index']
  #allocation1 [shape = 'u32[144,128]{1,0:T(1,128)}', space=vmem, size = 0x12000, scoped, tag = 'internal scratch']
  #allocation2 [shape = 'f32[12,128]{1,0:T(8,128)}', space=vmem, size = 0x2000, scoped, tag = 'scratch operand']
  %s0 = inlined_call_operand.hbm [shape: f32[12,2048], index: 0, kind: input, shape index: {}]
  %s1 = inlined_call_operand.hbm [shape: bf16[2048,128], index: 1, kind: input, shape index: {}]
  %s2 = inlined_call_operand.vmem [shape: f32[1,128], index: 2, kind: input, shape index: {}]
  %s3 = inlined_call_operand.hbm [shape: f32[12,128], index: 3, kind: output, shape index: {}]
  %s4 = sld [smem:[#allocation0]]
  $region61: #{tpu_custom_call.1} parent=0
    _
  %s6 = ssub.s32 1, %s4
  %s7 = scalar_select 0, %s6, %s4
  $region1: #{tpu_custom_call.1} parent=0
    #allocation3 [shape = 'u8[131072]{0}', space=vmem, size = 0x20000, scoped, tag = 'input window, operand 0']
    #allocation4 [shape = 's32[2]{0}', space=sflag, size = 0x8, scoped, tag = 'scoped memory for tpu_custom_call.1']
    #allocation5 [shape = 's32[2]{0}', space=sflag, size = 0x8, scoped, tag = 'scoped memory for tpu_custom_call.1']
    #allocation6 [shape = 'u8[524288]{0}', space=vmem, size = 0x80000, scoped, tag = 'input window, operand 1']
    #allocation7 [shape = 's32[2]{0}', space=sflag, size = 0x8, scoped, tag = 'scoped memory for tpu_custom_call.1']
    #allocation8 [shape = 'u8[8192]{0}', space=vmem, size = 0x2000, scoped, tag = 'output window, operand 0, single buffered']
    %8 = vsyncpa [#allocation4], 0
    %s9 = scalar_lea.sflag [#allocation4], 1
    %10 = vsyncpa %s9, 0
    %11 = vsyncpa [#allocation7], 0
    %s12 = scalar_lea.sflag [#allocation7], 1
    %13 = vsyncpa %s12, 0
    %14 = vsyncpa [#allocation5], 0
    loop: start=0, step=1, limit=4
    $region2: #{tpu_custom_call.1} parent=1 // loop_pre_header
      _
    $region3: #{tpu_custom_call.1} parent=1 // loop_header
      %s16 = sphi 0, %s20
      %p17 = scmp.ge.s32.totalorder %s16, 4
      %s26 = sphi 0, %s28
      %s29 = sphi 0, %s26
      %s30 = sphi 0, %s29
      %s46 = sphi 0, %s30
      %s52 = sphi 0, %s54
      %s55 = sphi 0, %s52
      %s56 = sphi 0, %s55
      %s72 = sphi 0, %s56
      %s76 = sphi 0, %s76
      %s78 = sphi 0, %s76
      %s79 = sphi 0, %s78
      %s93 = sphi 0, %s79
      %s97 = sphi 0, %s97
      %s99 = sphi 0, %s97
      %s100 = sphi 0, %s99
      %s114 = sphi 0, %s100
    $region4: #{tpu_custom_call.1} parent=1 // loop_header_branch
      %19 = sbr.rel (%p17) target = $region8
    $region5: #{tpu_custom_call.1} parent=1 // loop_body
      %s21 = ssub.s32 %s16, 1
      %s22 = ssub.s32 %s16, 2
      %s23 = sadd.s32 %s16, 1
      %s24 = ssub.s32 %s16, %s23
      %p25 = scmp.eq.s32.totalorder %s24, 0
      %s27 = sadd.s32 %s26, 1
      %s28 = scalar_select %p25, %s26, %s27
      %p31 = pneg %p25
      %p32 = scmp.eq.s32.totalorder %s16, 1
      %p33 = por %p31, %p32
      %p34 = scmp.ne.s32.totalorder %s26, %s29
      %p35 = scmp.eq.s32.totalorder %s16, 0
      %p36 = por %p34, %p35
      %p37 = scmp.ne.s32.totalorder %s26, %s29
      %p38 = scmp.eq.s32.totalorder %s21, 1
      %p39 = por %p37, %p38
      %p40 = scmp.ne.s32.totalorder %s29, %s30
      %p41 = scmp.eq.s32.totalorder %s21, 0
      %p42 = por %p40, %p41
      %p43 = scmp.ne.s32.totalorder %s29, %s30
      %p44 = scmp.eq.s32.totalorder %s22, 1
      %p45 = por %p43, %p44
      %p47 = scmp.ne.s32.totalorder %s30, %s46
      %p48 = scmp.eq.s32.totalorder %s22, 0
      %p49 = por %p47, %p48
      %s50 = ssub.s32 %s16, %s23
      %p51 = scmp.eq.s32.totalorder %s50, 0
      %s53 = sadd.s32 %s52, 1
      %s54 = scalar_select %p51, %s52, %s53
      %p57 = pneg %p51
      %p58 = scmp.eq.s32.totalorder %s16, 1
      %p59 = por %p57, %p58
      %p60 = scmp.ne.s32.totalorder %s52, %s55
      %p61 = scmp.eq.s32.totalorder %s16, 0
      %p62 = por %p60, %p61
      %p63 = scmp.ne.s32.totalorder %s52, %s55
      %p64 = scmp.eq.s32.totalorder %s21, 1
      %p65 = por %p63, %p64
      %p66 = scmp.ne.s32.totalorder %s55, %s56
      %p67 = scmp.eq.s32.totalorder %s21, 0
      %p68 = por %p66, %p67
      %p69 = scmp.ne.s32.totalorder %s55, %s56
      %p70 = scmp.eq.s32.totalorder %s22, 1
      %p71 = por %p69, %p70
      %p73 = scmp.ne.s32.totalorder %s56, %s72
      %p74 = scmp.eq.s32.totalorder %s22, 0
      %p75 = por %p73, %p74
      %s77 = sadd.s32 %s76, 1
      %p80 = scmp.eq.s32.totalorder %s16, 1
      %p81 = scmp.ne.s32.totalorder %s76, %s78
      %p82 = scmp.eq.s32.totalorder %s16, 0
      %p83 = por %p81, %p82
      %p84 = scmp.ne.s32.totalorder %s76, %s78
      %p85 = scmp.eq.s32.totalorder %s21, 1
      %p86 = por %p84, %p85
      %p87 = scmp.ne.s32.totalorder %s78, %s79
      %p88 = scmp.eq.s32.totalorder %s21, 0
      %p89 = por %p87, %p88
      %p90 = scmp.ne.s32.totalorder %s78, %s79
      %p91 = scmp.eq.s32.totalorder %s22, 1
      %p92 = por %p90, %p91
      %p94 = scmp.ne.s32.totalorder %s79, %s93
      %p95 = scmp.eq.s32.totalorder %s22, 0
      %p96 = por %p94, %p95
      %s98 = sadd.s32 %s97, 1
      %p101 = scmp.eq.s32.totalorder %s16, 1
      %p102 = scmp.ne.s32.totalorder %s97, %s99
      %p103 = scmp.eq.s32.totalorder %s16, 0
      %p104 = por %p102, %p103
      %p105 = scmp.ne.s32.totalorder %s97, %s99
      %p106 = scmp.eq.s32.totalorder %s21, 1
      %p107 = por %p105, %p106
      %p108 = scmp.ne.s32.totalorder %s99, %s100
      %p109 = scmp.eq.s32.totalorder %s21, 0
      %p110 = por %p108, %p109
      %p111 = scmp.ne.s32.totalorder %s99, %s100
      %p112 = scmp.eq.s32.totalorder %s22, 1
      %p113 = por %p111, %p112
      %p115 = scmp.ne.s32.totalorder %s100, %s114
      %p116 = scmp.eq.s32.totalorder %s22, 0
      %p117 = por %p115, %p116
      %p118 = scmp.le.s32.totalorder 1, %s16
      %p119 = scmp.lt.s32.totalorder %s16, 3
      %p120 = pnand %p118, %p119
      %p121 = pneg %p120
      // Predicated region
      $region9: #{tpu_custom_call.1} parent=5 // pred_check
        _
      $region10: #{tpu_custom_call.1} parent=5 // pred_check_branch
        %123 = sbr.rel (%p120) target = $region12
      $region11: #{tpu_custom_call.1} parent=5 // pred_region
        %s124 = ssub.s32 %s16, 1
        // Predicated region
        $region13: #{tpu_custom_call.1} parent=11 // pred_check
          %p125 = pneg %p89
        $region14: #{tpu_custom_call.1} parent=11 // pred_check_branch
          %127 = sbr.rel (%p125) target = $region16
        $region15: #{tpu_custom_call.1} parent=11 // pred_region
          _
        $region16: #{tpu_custom_call.1} parent=11 // pred_fallthru
          _
      $region12: #{tpu_custom_call.1} parent=5 // pred_fallthru
        _
      %p128 = scmp.lt.s32.totalorder %s16, 2
      // Predicated region
      $region17: #{tpu_custom_call.1} parent=5 // pred_check
        %p129 = pneg %p128
      $region18: #{tpu_custom_call.1} parent=5 // pred_check_branch
        %131 = sbr.rel (%p129) target = $region20
      $region19: #{tpu_custom_call.1} parent=5 // pred_region
        // Predicated region
        $region21: #{tpu_custom_call.1} parent=19 // pred_check
          %p132 = pneg %p36
        $region22: #{tpu_custom_call.1} parent=19 // pred_check_branch
          %134 = sbr.rel (%p132) target = $region24
        $region23: #{tpu_custom_call.1} parent=19 // pred_region
          %s135 = sand.u32 %s26, 1
          %s136 = scalar_lea.sflag [#allocation4], %s135
          %s137 = sand.u32 %s26, 1
          %s138 = smul.addr %s137, 128
          %s139 = scalar_lea.vmem [#allocation3], %s138
          %s140 = smul.u32 8, %s16
          %s142 = ssub.s32 2048, 2048
          %143 = vsyncadd %s136, %s142
          %s144 = smul.addr %s140, 128
          %s145 = scalar_lea.hbm %s0, %s144
          %s146 = sshll.u32 %s139, 4
          %s147 = int_to_ptr.vmem [resolvable:$true] %s146
          %152 = dma.hbm_to_vmem [thread:$0]  %s145, 2048, %s147, %s136, 2048, 1024, 64
        $region24: #{tpu_custom_call.1} parent=19 // pred_fallthru
          _
        // Predicated region
        $region25: #{tpu_custom_call.1} parent=19 // pred_check
          %p153 = pneg %p62
        $region26: #{tpu_custom_call.1} parent=19 // pred_check_branch
          %155 = sbr.rel (%p153) target = $region28
        $region27: #{tpu_custom_call.1} parent=19 // pred_region
          %s156 = sand.u32 %s52, 1
          %s157 = scalar_lea.sflag [#allocation7], %s156
          %s158 = sand.u32 %s52, 1
          %s159 = smul.addr %s158, 512
          %s160 = scalar_lea.vmem [#allocation6], %s159
          %s161 = smul.u32 128, %s16
          %s163 = ssub.s32 8192, 8192
          %164 = vsyncadd %s157, %s163
          %s165 = smul.addr %s161, 64
          %s166 = scalar_lea.hbm %s1, %s165
          %s167 = sshll.u32 %s160, 4
          %s168 = int_to_ptr.vmem [resolvable:$true] %s167
          %173 = dma.hbm_to_vmem [thread:$0]  %s166, 8192, %s168, %s157, 64, 64, 4
        $region28: #{tpu_custom_call.1} parent=19 // pred_fallthru
          _
      $region20: #{tpu_custom_call.1} parent=5 // pred_fallthru
        _
      %p174 = scmp.le.s32.totalorder 1, %s16
      %p175 = scmp.lt.s32.totalorder %s16, 3
      %p176 = pnand %p174, %p175
      %p177 = pneg %p176
      // Predicated region
      $region29: #{tpu_custom_call.1} parent=5 // pred_check
        _
      $region30: #{tpu_custom_call.1} parent=5 // pred_check_branch
        %179 = sbr.rel (%p176) target = $region32
      $region31: #{tpu_custom_call.1} parent=5 // pred_region
        %s180 = ssub.s32 %s16, 1
        %s181 = sand.u32 %s29, 1
        %s182 = scalar_lea.sflag [#allocation4], %s181
        %s183 = sand.u32 %s29, 1
        %s184 = smul.addr %s183, 128
        %s185 = scalar_lea.vmem [#allocation3], %s184
        // Predicated region
        $region33: #{tpu_custom_call.1} parent=31 // pred_check
          %p186 = pneg %p42
        $region34: #{tpu_custom_call.1} parent=31 // pred_check_branch
          %188 = sbr.rel (%p186) target = $region36
        $region35: #{tpu_custom_call.1} parent=31 // pred_region
          %189 = dma.done %s182, 2048
        $region36: #{tpu_custom_call.1} parent=31 // pred_fallthru
          _
        %s190 = sand.u32 %s55, 1
        %s191 = scalar_lea.sflag [#allocation7], %s190
        %s192 = sand.u32 %s55, 1
        %s193 = smul.addr %s192, 512
        %s194 = scalar_lea.vmem [#allocation6], %s193
        // Predicated region
        $region37: #{tpu_custom_call.1} parent=31 // pred_check
          %p195 = pneg %p68
        $region38: #{tpu_custom_call.1} parent=31 // pred_check_branch
          %197 = sbr.rel (%p195) target = $region40
        $region39: #{tpu_custom_call.1} parent=31 // pred_region
          %198 = dma.done %s191, 8192
        $region40: #{tpu_custom_call.1} parent=31 // pred_fallthru
          _
        %s199 = sand.u32 %s29, 1
        %s200 = scalar_lea.sflag [#allocation4], %s199
        %s201 = sand.u32 %s29, 1
        %s202 = smul.addr %s201, 128
        %s203 = scalar_lea.vmem [#allocation3], %s202
        %p204 = pneg %p42
        %p205 = pneg %p39
        %s206 = sand.u32 %s55, 1
        %s207 = scalar_lea.sflag [#allocation7], %s206
        %s208 = sand.u32 %s55, 1
        %s209 = smul.addr %s208, 512
        %s210 = scalar_lea.vmem [#allocation6], %s209
        %p211 = pneg %p68
        %p212 = pneg %p65
        %p213 = pneg %p89
        %p214 = pneg %p86
        %p215 = pneg %p110
        %p216 = pneg %p107
        %s217 = smul.u32 8, %s21
        %s218 = smul.u32 128, %s21
        %p220 = scmp.eq.s32.totalorder %s21, 0
        // Predicated region
        $region41: #{tpu_custom_call.1} parent=31 // pred_check
          %p221 = pneg %p220
        $region42: #{tpu_custom_call.1} parent=31 // pred_check_branch
          %223 = sbr.rel (%p221) target = $region44
        $region43: #{tpu_custom_call.1} parent=31 // pred_region
          %224 = vst [vmem:[#allocation2] sm:$0xff] 0.0
          %225 = vst [vmem:[#allocation2 + $0x8] sm:$0xf] 0.0
        $region44: #{tpu_custom_call.1} parent=31 // pred_fallthru
          _
        %v226 = vld [vmem:[#allocation2] sm:$0xff]
        %v227 = vld [vmem:[#allocation2 + $0x8] sm:$0xf]
        %v228 = vld [vmem:[%s185] sm:$0xff]
        %v229 = vld [vmem:[%s185 + $0x8] sm:$0xff]
        %v230 = vld [vmem:[%s185 + $0x10] sm:$0xff]
        %v231 = vld [vmem:[%s185 + $0x18] sm:$0xff]
        %v232 = vld [vmem:[%s185 + $0x20] sm:$0xff]
        %v233 = vld [vmem:[%s185 + $0x28] sm:$0xff]
        %v234 = vld [vmem:[%s185 + $0x30] sm:$0xff]
        %v235 = vld [vmem:[%s185 + $0x38] sm:$0xff]
        %v236 = vld [vmem:[%s185 + $0x40] sm:$0xf]
        %v237 = vld [vmem:[%s185 + $0x48] sm:$0xf]
        %v238 = vld [vmem:[%s185 + $0x50] sm:$0xf]
        %v239 = vld [vmem:[%s185 + $0x58] sm:$0xf]
        %v240 = vld [vmem:[%s185 + $0x60] sm:$0xf]
        %v241 = vld [vmem:[%s185 + $0x68] sm:$0xf]
        %v242 = vld [vmem:[%s185 + $0x70] sm:$0xf]
        %v243 = vld [vmem:[%s185 + $0x78] sm:$0xf]
        %v244 = vpack.c.bf16 %v236, %v228
        %v245 = vpack.c.bf16 %v237, %v229
        %v246 = vpack.c.bf16 %v238, %v230
        %v247 = vpack.c.bf16 %v239, %v231
        %v248 = vpack.c.bf16 %v240, %v232
        %v249 = vpack.c.bf16 %v241, %v233
        %v250 = vpack.c.bf16 %v242, %v234
        %v251 = vpack.c.bf16 %v243, %v235
        %v252 = vld [vmem:[%s194] sm:$0xf]
        %v253 = vld [vmem:[%s194 + $0x4] sm:$0xf]
        %v254 = vld [vmem:[%s194 + $0x8] sm:$0xf]
        %v255 = vld [vmem:[%s194 + $0xc] sm:$0xf]
        %v256 = vld [vmem:[%s194 + $0x10] sm:$0xf]
        %v257 = vld [vmem:[%s194 + $0x14] sm:$0xf]
        %v258 = vld [vmem:[%s194 + $0x18] sm:$0xf]
        %v259 = vld [vmem:[%s194 + $0x1c] sm:$0xf]
        %v260 = vld [vmem:[%s194 + $0x20] sm:$0xf]
        %v261 = vld [vmem:[%s194 + $0x24] sm:$0xf]
        %v262 = vld [vmem:[%s194 + $0x28] sm:$0xf]
        %v263 = vld [vmem:[%s194 + $0x2c] sm:$0xf]
        %v264 = vld [vmem:[%s194 + $0x30] sm:$0xf]
        %v265 = vld [vmem:[%s194 + $0x34] sm:$0xf]
        %v266 = vld [vmem:[%s194 + $0x38] sm:$0xf]
        %v267 = vld [vmem:[%s194 + $0x3c] sm:$0xf]
        %v268 = vld [vmem:[%s194 + $0x40] sm:$0xf]
        %v269 = vld [vmem:[%s194 + $0x44] sm:$0xf]
        %v270 = vld [vmem:[%s194 + $0x48] sm:$0xf]
        %v271 = vld [vmem:[%s194 + $0x4c] sm:$0xf]
        %v272 = vld [vmem:[%s194 + $0x50] sm:$0xf]
        %v273 = vld [vmem:[%s194 + $0x54] sm:$0xf]
        %v274 = vld [vmem:[%s194 + $0x58] sm:$0xf]
        %v275 = vld [vmem:[%s194 + $0x5c] sm:$0xf]
        %v276 = vld [vmem:[%s194 + $0x60] sm:$0xf]
        %v277 = vld [vmem:[%s194 + $0x64] sm:$0xf]
        %v278 = vld [vmem:[%s194 + $0x68] sm:$0xf]
        %v279 = vld [vmem:[%s194 + $0x6c] sm:$0xf]
        %v280 = vld [vmem:[%s194 + $0x70] sm:$0xf]
        %v281 = vld [vmem:[%s194 + $0x74] sm:$0xf]
        %v282 = vld [vmem:[%s194 + $0x78] sm:$0xf]
        %v283 = vld [vmem:[%s194 + $0x7c] sm:$0xf]
        %v284 = vld [vmem:[%s194 + $0x80] sm:$0xf]
        %v285 = vld [vmem:[%s194 + $0x84] sm:$0xf]
        %v286 = vld [vmem:[%s194 + $0x88] sm:$0xf]
        %v287 = vld [vmem:[%s194 + $0x8c] sm:$0xf]
        %v288 = vld [vmem:[%s194 + $0x90] sm:$0xf]
        %v289 = vld [vmem:[%s194 + $0x94] sm:$0xf]
        %v290 = vld [vmem:[%s194 + $0x98] sm:$0xf]
        %v291 = vld [vmem:[%s194 + $0x9c] sm:$0xf]
        %v292 = vld [vmem:[%s194 + $0xa0] sm:$0xf]
        %v293 = vld [vmem:[%s194 + $0xa4] sm:$0xf]
        %v294 = vld [vmem:[%s194 + $0xa8] sm:$0xf]
        %v295 = vld [vmem:[%s194 + $0xac] sm:$0xf]
        %v296 = vld [vmem:[%s194 + $0xb0] sm:$0xf]
        %v297 = vld [vmem:[%s194 + $0xb4] sm:$0xf]
        %v298 = vld [vmem:[%s194 + $0xb8] sm:$0xf]
        %v299 = vld [vmem:[%s194 + $0xbc] sm:$0xf]
        %v300 = vld [vmem:[%s194 + $0xc0] sm:$0xf]
        %v301 = vld [vmem:[%s194 + $0xc4] sm:$0xf]
        %v302 = vld [vmem:[%s194 + $0xc8] sm:$0xf]
        %v303 = vld [vmem:[%s194 + $0xcc] sm:$0xf]
        %v304 = vld [vmem:[%s194 + $0xd0] sm:$0xf]
        %v305 = vld [vmem:[%s194 + $0xd4] sm:$0xf]
        %v306 = vld [vmem:[%s194 + $0xd8] sm:$0xf]
        %v307 = vld [vmem:[%s194 + $0xdc] sm:$0xf]
        %v308 = vld [vmem:[%s194 + $0xe0] sm:$0xf]
        %v309 = vld [vmem:[%s194 + $0xe4] sm:$0xf]
        %v310 = vld [vmem:[%s194 + $0xe8] sm:$0xf]
        %v311 = vld [vmem:[%s194 + $0xec] sm:$0xf]
        %v312 = vld [vmem:[%s194 + $0xf0] sm:$0xf]
        %v313 = vld [vmem:[%s194 + $0xf4] sm:$0xf]
        %v314 = vld [vmem:[%s194 + $0xf8] sm:$0xf]
        %v315 = vld [vmem:[%s194 + $0xfc] sm:$0xf]
        %v316 = vld [vmem:[%s194 + $0x100] sm:$0xf]
        %v317 = vld [vmem:[%s194 + $0x104] sm:$0xf]
        %v318 = vld [vmem:[%s194 + $0x108] sm:$0xf]
        %v319 = vld [vmem:[%s194 + $0x10c] sm:$0xf]
        %v320 = vld [vmem:[%s194 + $0x110] sm:$0xf]
        %v321 = vld [vmem:[%s194 + $0x114] sm:$0xf]
        %v322 = vld [vmem:[%s194 + $0x118] sm:$0xf]
        %v323 = vld [vmem:[%s194 + $0x11c] sm:$0xf]
        %v324 = vld [vmem:[%s194 + $0x120] sm:$0xf]
        %v325 = vld [vmem:[%s194 + $0x124] sm:$0xf]
        %v326 = vld [vmem:[%s194 + $0x128] sm:$0xf]
        %v327 = vld [vmem:[%s194 + $0x12c] sm:$0xf]
        %v328 = vld [vmem:[%s194 + $0x130] sm:$0xf]
        %v329 = vld [vmem:[%s194 + $0x134] sm:$0xf]
        %v330 = vld [vmem:[%s194 + $0x138] sm:$0xf]
        %v331 = vld [vmem:[%s194 + $0x13c] sm:$0xf]
        %v332 = vld [vmem:[%s194 + $0x140] sm:$0xf]
        %v333 = vld [vmem:[%s194 + $0x144] sm:$0xf]
        %v334 = vld [vmem:[%s194 + $0x148] sm:$0xf]
        %v335 = vld [vmem:[%s194 + $0x14c] sm:$0xf]
        %v336 = vld [vmem:[%s194 + $0x150] sm:$0xf]
        %v337 = vld [vmem:[%s194 + $0x154] sm:$0xf]
        %v338 = vld [vmem:[%s194 + $0x158] sm:$0xf]
        %v339 = vld [vmem:[%s194 + $0x15c] sm:$0xf]
        %v340 = vld [vmem:[%s194 + $0x160] sm:$0xf]
        %v341 = vld [vmem:[%s194 + $0x164] sm:$0xf]
        %v342 = vld [vmem:[%s194 + $0x168] sm:$0xf]
        %v343 = vld [vmem:[%s194 + $0x16c] sm:$0xf]
        %v344 = vld [vmem:[%s194 + $0x170] sm:$0xf]
        %v345 = vld [vmem:[%s194 + $0x174] sm:$0xf]
        %v346 = vld [vmem:[%s194 + $0x178] sm:$0xf]
        %v347 = vld [vmem:[%s194 + $0x17c] sm:$0xf]
        %v348 = vld [vmem:[%s194 + $0x180] sm:$0xf]
        %v349 = vld [vmem:[%s194 + $0x184] sm:$0xf]
        %v350 = vld [vmem:[%s194 + $0x188] sm:$0xf]
        %v351 = vld [vmem:[%s194 + $0x18c] sm:$0xf]
        %v352 = vld [vmem:[%s194 + $0x190] sm:$0xf]
        %v353 = vld [vmem:[%s194 + $0x194] sm:$0xf]
        %v354 = vld [vmem:[%s194 + $0x198] sm:$0xf]
        %v355 = vld [vmem:[%s194 + $0x19c] sm:$0xf]
        %v356 = vld [vmem:[%s194 + $0x1a0] sm:$0xf]
        %v357 = vld [vmem:[%s194 + $0x1a4] sm:$0xf]
        %v358 = vld [vmem:[%s194 + $0x1a8] sm:$0xf]
        %v359 = vld [vmem:[%s194 + $0x1ac] sm:$0xf]
        %v360 = vld [vmem:[%s194 + $0x1b0] sm:$0xf]
        %v361 = vld [vmem:[%s194 + $0x1b4] sm:$0xf]
        %v362 = vld [vmem:[%s194 + $0x1b8] sm:$0xf]
        %v363 = vld [vmem:[%s194 + $0x1bc] sm:$0xf]
        %v364 = vld [vmem:[%s194 + $0x1c0] sm:$0xf]
        %v365 = vld [vmem:[%s194 + $0x1c4] sm:$0xf]
        %v366 = vld [vmem:[%s194 + $0x1c8] sm:$0xf]
        %v367 = vld [vmem:[%s194 + $0x1cc] sm:$0xf]
        %v368 = vld [vmem:[%s194 + $0x1d0] sm:$0xf]
        %v369 = vld [vmem:[%s194 + $0x1d4] sm:$0xf]
        %v370 = vld [vmem:[%s194 + $0x1d8] sm:$0xf]
        %v371 = vld [vmem:[%s194 + $0x1dc] sm:$0xf]
        %v372 = vld [vmem:[%s194 + $0x1e0] sm:$0xf]
        %v373 = vld [vmem:[%s194 + $0x1e4] sm:$0xf]
        %v374 = vld [vmem:[%s194 + $0x1e8] sm:$0xf]
        %v375 = vld [vmem:[%s194 + $0x1ec] sm:$0xf]
        %v376 = vld [vmem:[%s194 + $0x1f0] sm:$0xf]
        %v377 = vld [vmem:[%s194 + $0x1f4] sm:$0xf]
        %v378 = vld [vmem:[%s194 + $0x1f8] sm:$0xf]
        %v379 = vld [vmem:[%s194 + $0x1fc] sm:$0xf]
        %v508 = vunpack.c.l.b16 %v252
        %v509 = vunpack.c.l.b16 %v253
        %v510 = vunpack.c.l.b16 %v254
        %v511 = vunpack.c.l.b16 %v255
        %v512 = vunpack.c.l.b16 %v256
        %v513 = vunpack.c.l.b16 %v257
        %v514 = vunpack.c.l.b16 %v258
        %v515 = vunpack.c.l.b16 %v259
        %v516 = vunpack.c.l.b16 %v260
        %v517 = vunpack.c.l.b16 %v261
        %v518 = vunpack.c.l.b16 %v262
        %v519 = vunpack.c.l.b16 %v263
        %v520 = vunpack.c.l.b16 %v264
        %v521 = vunpack.c.l.b16 %v265
        %v522 = vunpack.c.l.b16 %v266
        %v523 = vunpack.c.l.b16 %v267
        %v524 = vunpack.c.l.b16 %v268
        %v525 = vunpack.c.l.b16 %v269
        %v526 = vunpack.c.l.b16 %v270
        %v527 = vunpack.c.l.b16 %v271
        %v528 = vunpack.c.l.b16 %v272
        %v529 = vunpack.c.l.b16 %v273
        %v530 = vunpack.c.l.b16 %v274
        %v531 = vunpack.c.l.b16 %v275
        %v532 = vunpack.c.l.b16 %v276
        %v533 = vunpack.c.l.b16 %v277
        %v534 = vunpack.c.l.b16 %v278
        %v535 = vunpack.c.l.b16 %v279
        %v536 = vunpack.c.l.b16 %v280
        %v537 = vunpack.c.l.b16 %v281
        %v538 = vunpack.c.l.b16 %v282
        %v539 = vunpack.c.l.b16 %v283
        %v540 = vunpack.c.l.b16 %v284
        %v541 = vunpack.c.l.b16 %v285
        %v542 = vunpack.c.l.b16 %v286
        %v543 = vunpack.c.l.b16 %v287
        %v544 = vunpack.c.l.b16 %v288
        %v545 = vunpack.c.l.b16 %v289
        %v546 = vunpack.c.l.b16 %v290
        %v547 = vunpack.c.l.b16 %v291
        %v548 = vunpack.c.l.b16 %v292
        %v549 = vunpack.c.l.b16 %v293
        %v550 = vunpack.c.l.b16 %v294
        %v551 = vunpack.c.l.b16 %v295
        %v552 = vunpack.c.l.b16 %v296
        %v553 = vunpack.c.l.b16 %v297
        %v554 = vunpack.c.l.b16 %v298
        %v555 = vunpack.c.l.b16 %v299
        %v556 = vunpack.c.l.b16 %v300
        %v557 = vunpack.c.l.b16 %v301
        %v558 = vunpack.c.l.b16 %v302
        %v559 = vunpack.c.l.b16 %v303
        %v560 = vunpack.c.l.b16 %v304
        %v561 = vunpack.c.l.b16 %v305
        %v562 = vunpack.c.l.b16 %v306
        %v563 = vunpack.c.l.b16 %v307
        %v564 = vunpack.c.l.b16 %v308
        %v565 = vunpack.c.l.b16 %v309
        %v566 = vunpack.c.l.b16 %v310
        %v567 = vunpack.c.l.b16 %v311
        %v568 = vunpack.c.l.b16 %v312
        %v569 = vunpack.c.l.b16 %v313
        %v570 = vunpack.c.l.b16 %v314
        %v571 = vunpack.c.l.b16 %v315
        %v572 = vunpack.c.l.b16 %v316
        %v573 = vunpack.c.l.b16 %v317
        %v574 = vunpack.c.l.b16 %v318
        %v575 = vunpack.c.l.b16 %v319
        %v576 = vunpack.c.l.b16 %v320
        %v577 = vunpack.c.l.b16 %v321
        %v578 = vunpack.c.l.b16 %v322
        %v579 = vunpack.c.l.b16 %v323
        %v580 = vunpack.c.l.b16 %v324
        %v581 = vunpack.c.l.b16 %v325
        %v582 = vunpack.c.l.b16 %v326
        %v583 = vunpack.c.l.b16 %v327
        %v584 = vunpack.c.l.b16 %v328
        %v585 = vunpack.c.l.b16 %v329
        %v586 = vunpack.c.l.b16 %v330
        %v587 = vunpack.c.l.b16 %v331
        %v588 = vunpack.c.l.b16 %v332
        %v589 = vunpack.c.l.b16 %v333
        %v590 = vunpack.c.l.b16 %v334
        %v591 = vunpack.c.l.b16 %v335
        %v592 = vunpack.c.l.b16 %v336
        %v593 = vunpack.c.l.b16 %v337
        %v594 = vunpack.c.l.b16 %v338
        %v595 = vunpack.c.l.b16 %v339
        %v596 = vunpack.c.l.b16 %v340
        %v597 = vunpack.c.l.b16 %v341
        %v598 = vunpack.c.l.b16 %v342
        %v599 = vunpack.c.l.b16 %v343
        %v600 = vunpack.c.l.b16 %v344
        %v601 = vunpack.c.l.b16 %v345
        %v602 = vunpack.c.l.b16 %v346
        %v603 = vunpack.c.l.b16 %v347
        %v604 = vunpack.c.l.b16 %v348
        %v605 = vunpack.c.l.b16 %v349
        %v606 = vunpack.c.l.b16 %v350
        %v607 = vunpack.c.l.b16 %v351
        %v608 = vunpack.c.l.b16 %v352
        %v609 = vunpack.c.l.b16 %v353
        %v610 = vunpack.c.l.b16 %v354
        %v611 = vunpack.c.l.b16 %v355
        %v612 = vunpack.c.l.b16 %v356
        %v613 = vunpack.c.l.b16 %v357
        %v614 = vunpack.c.l.b16 %v358
        %v615 = vunpack.c.l.b16 %v359
        %v616 = vunpack.c.l.b16 %v360
        %v617 = vunpack.c.l.b16 %v361
        %v618 = vunpack.c.l.b16 %v362
        %v619 = vunpack.c.l.b16 %v363
        %v620 = vunpack.c.l.b16 %v364
        %v621 = vunpack.c.l.b16 %v365
        %v622 = vunpack.c.l.b16 %v366
        %v623 = vunpack.c.l.b16 %v367
        %v624 = vunpack.c.l.b16 %v368
        %v625 = vunpack.c.l.b16 %v369
        %v626 = vunpack.c.l.b16 %v370
        %v627 = vunpack.c.l.b16 %v371
        %v628 = vunpack.c.l.b16 %v372
        %v629 = vunpack.c.l.b16 %v373
        %v630 = vunpack.c.l.b16 %v374
        %v631 = vunpack.c.l.b16 %v375
        %v632 = vunpack.c.l.b16 %v376
        %v633 = vunpack.c.l.b16 %v377
        %v634 = vunpack.c.l.b16 %v378
        %v635 = vunpack.c.l.b16 %v379
        %v636 = vpack.c.b16 %v509, %v508
        %v637 = vpack.c.b16 %v511, %v510
        %v638 = vpack.c.b16 %v513, %v512
        %v639 = vpack.c.b16 %v515, %v514
        %v640 = vpack.c.b16 %v517, %v516
        %v641 = vpack.c.b16 %v519, %v518
        %v642 = vpack.c.b16 %v521, %v520
        %v643 = vpack.c.b16 %v523, %v522
        %v644 = vpack.c.b16 %v525, %v524
        %v645 = vpack.c.b16 %v527, %v526
        %v646 = vpack.c.b16 %v529, %v528
        %v647 = vpack.c.b16 %v531, %v530
        %v648 = vpack.c.b16 %v533, %v532
        %v649 = vpack.c.b16 %v535, %v534
        %v650 = vpack.c.b16 %v537, %v536
        %v651 = vpack.c.b16 %v539, %v538
        %v652 = vpack.c.b16 %v541, %v540
        %v653 = vpack.c.b16 %v543, %v542
        %v654 = vpack.c.b16 %v545, %v544
        %v655 = vpack.c.b16 %v547, %v546
        %v656 = vpack.c.b16 %v549, %v548
        %v657 = vpack.c.b16 %v551, %v550
        %v658 = vpack.c.b16 %v553, %v552
        %v659 = vpack.c.b16 %v555, %v554
        %v660 = vpack.c.b16 %v557, %v556
        %v661 = vpack.c.b16 %v559, %v558
        %v662 = vpack.c.b16 %v561, %v560
        %v663 = vpack.c.b16 %v563, %v562
        %v664 = vpack.c.b16 %v565, %v564
        %v665 = vpack.c.b16 %v567, %v566
        %v666 = vpack.c.b16 %v569, %v568
        %v667 = vpack.c.b16 %v571, %v570
        %v668 = vpack.c.b16 %v573, %v572
        %v669 = vpack.c.b16 %v575, %v574
        %v670 = vpack.c.b16 %v577, %v576
        %v671 = vpack.c.b16 %v579, %v578
        %v672 = vpack.c.b16 %v581, %v580
        %v673 = vpack.c.b16 %v583, %v582
        %v674 = vpack.c.b16 %v585, %v584
        %v675 = vpack.c.b16 %v587, %v586
        %v676 = vpack.c.b16 %v589, %v588
        %v677 = vpack.c.b16 %v591, %v590
        %v678 = vpack.c.b16 %v593, %v592
        %v679 = vpack.c.b16 %v595, %v594
        %v680 = vpack.c.b16 %v597, %v596
        %v681 = vpack.c.b16 %v599, %v598
        %v682 = vpack.c.b16 %v601, %v600
        %v683 = vpack.c.b16 %v603, %v602
        %v684 = vpack.c.b16 %v605, %v604
        %v685 = vpack.c.b16 %v607, %v606
        %v686 = vpack.c.b16 %v609, %v608
        %v687 = vpack.c.b16 %v611, %v610
        %v688 = vpack.c.b16 %v613, %v612
        %v689 = vpack.c.b16 %v615, %v614
        %v690 = vpack.c.b16 %v617, %v616
        %v691 = vpack.c.b16 %v619, %v618
        %v692 = vpack.c.b16 %v621, %v620
        %v693 = vpack.c.b16 %v623, %v622
        %v694 = vpack.c.b16 %v625, %v624
        %v695 = vpack.c.b16 %v627, %v626
        %v696 = vpack.c.b16 %v629, %v628
        %v697 = vpack.c.b16 %v631, %v630
        %v698 = vpack.c.b16 %v633, %v632
        %v699 = vpack.c.b16 %v635, %v634
        %764 = vmatprep.subr.bf16.mxu0 0
        %765 = vmatpush1.bf16.msra.mxu0 %v636
        %766 = vmatprep.subr.bf16.mxu0 0
        %767 = vmatpush1.bf16.msra.mxu0 %v637
        %768 = vmatprep.subr.bf16.mxu0 0
        %769 = vmatpush1.bf16.msra.mxu0 %v638
        %770 = vmatprep.subr.bf16.mxu0 0
        %771 = vmatpush1.bf16.msra.mxu0 %v639
        %772 = vmatprep.subr.bf16.mxu0 0
        %773 = vmatpush1.bf16.msra.mxu0 %v640
        %774 = vmatprep.subr.bf16.mxu0 0
        %775 = vmatpush1.bf16.msra.mxu0 %v641
        %776 = vmatprep.subr.bf16.mxu0 0
        %777 = vmatpush1.bf16.msra.mxu0 %v642
        %778 = vmatprep.subr.bf16.mxu0 0
        %779 = vmatpush1.bf16.msra.mxu0 %v643
        %780 = vmatprep.subr.bf16.mxu0 0
        %781 = vmatpush1.bf16.msra.mxu0 %v644
        %782 = vmatprep.subr.bf16.mxu0 0
        %783 = vmatpush1.bf16.msra.mxu0 %v645
        %784 = vmatprep.subr.bf16.mxu0 0
        %785 = vmatpush1.bf16.msra.mxu0 %v646
        %786 = vmatprep.subr.bf16.mxu0 0
        %787 = vmatpush1.bf16.msra.mxu0 %v647
        %788 = vmatprep.subr.bf16.mxu0 0
        %789 = vmatpush1.bf16.msra.mxu0 %v648
        %790 = vmatprep.subr.bf16.mxu0 0
        %791 = vmatpush1.bf16.msra.mxu0 %v649
        %792 = vmatprep.subr.bf16.mxu0 0
        %793 = vmatpush1.bf16.msra.mxu0 %v650
        %794 = vmatprep.subr.bf16.mxu0 0
        %795 = vmatpush1.bf16.msra.mxu0 %v651
        %796 = vmatprep.mubr.bf16.mxu0 %v245
        %797 = vmatmul.mubr.bf16.gmra.mrb[0].mxu0 %v244
        %v798 = vpop.f32.mrb[0].mxu0
        %v799 = vadd.f32 0.0, %v798
        %v800 = vpop.f32.mrb[0].mxu0
        %v801 = vpop.f32.mrb[0].mxu0
        %v802 = vadd.f32 0.0, %v801
        %v803 = vpop.f32.mrb[0].mxu0
        %804 = vdwg.mxu0
        %805 = vmatprep.subr.bf16.mxu0 0
        %806 = vmatpush1.bf16.msra.mxu0 %v652
        %807 = vmatprep.subr.bf16.mxu0 0
        %808 = vmatpush1.bf16.msra.mxu0 %v653
        %809 = vmatprep.subr.bf16.mxu0 0
        %810 = vmatpush1.bf16.msra.mxu0 %v654
        %811 = vmatprep.subr.bf16.mxu0 0
        %812 = vmatpush1.bf16.msra.mxu0 %v655
        %813 = vmatprep.subr.bf16.mxu0 0
        %814 = vmatpush1.bf16.msra.mxu0 %v656
        %815 = vmatprep.subr.bf16.mxu0 0
        %816 = vmatpush1.bf16.msra.mxu0 %v657
        %817 = vmatprep.subr.bf16.mxu0 0
        %818 = vmatpush1.bf16.msra.mxu0 %v658
        %819 = vmatprep.subr.bf16.mxu0 0
        %820 = vmatpush1.bf16.msra.mxu0 %v659
        %821 = vmatprep.subr.bf16.mxu0 0
        %822 = vmatpush1.bf16.msra.mxu0 %v660
        %823 = vmatprep.subr.bf16.mxu0 0
        %824 = vmatpush1.bf16.msra.mxu0 %v661
        %825 = vmatprep.subr.bf16.mxu0 0
        %826 = vmatpush1.bf16.msra.mxu0 %v662
        %827 = vmatprep.subr.bf16.mxu0 0
        %828 = vmatpush1.bf16.msra.mxu0 %v663
        %829 = vmatprep.subr.bf16.mxu0 0
        %830 = vmatpush1.bf16.msra.mxu0 %v664
        %831 = vmatprep.subr.bf16.mxu0 0
        %832 = vmatpush1.bf16.msra.mxu0 %v665
        %833 = vmatprep.subr.bf16.mxu0 0
        %834 = vmatpush1.bf16.msra.mxu0 %v666
        %835 = vmatprep.subr.bf16.mxu0 0
        %836 = vmatpush1.bf16.msra.mxu0 %v667
        %837 = vmatprep.mubr.bf16.mxu0 %v247
        %838 = vmatmul.mubr.bf16.gmra.mrb[0].mxu0 %v246
        %v839 = vpop.f32.mrb[0].mxu0
        %v840 = vadd.f32 %v799, %v839
        %v841 = vpop.f32.mrb[0].mxu0
        %v842 = vpop.f32.mrb[0].mxu0
        %v843 = vadd.f32 %v802, %v842
        %v844 = vpop.f32.mrb[0].mxu0
        %845 = vdwg.mxu0
        %846 = vmatprep.subr.bf16.mxu0 0
        %847 = vmatpush1.bf16.msra.mxu0 %v668
        %848 = vmatprep.subr.bf16.mxu0 0
        %849 = vmatpush1.bf16.msra.mxu0 %v669
        %850 = vmatprep.subr.bf16.mxu0 0
        %851 = vmatpush1.bf16.msra.mxu0 %v670
        %852 = vmatprep.subr.bf16.mxu0 0
        %853 = vmatpush1.bf16.msra.mxu0 %v671
        %854 = vmatprep.subr.bf16.mxu0 0
        %855 = vmatpush1.bf16.msra.mxu0 %v672
        %856 = vmatprep.subr.bf16.mxu0 0
        %857 = vmatpush1.bf16.msra.mxu0 %v673
        %858 = vmatprep.subr.bf16.mxu0 0
        %859 = vmatpush1.bf16.msra.mxu0 %v674
        %860 = vmatprep.subr.bf16.mxu0 0
        %861 = vmatpush1.bf16.msra.mxu0 %v675
        %862 = vmatprep.subr.bf16.mxu0 0
        %863 = vmatpush1.bf16.msra.mxu0 %v676
        %864 = vmatprep.subr.bf16.mxu0 0
        %865 = vmatpush1.bf16.msra.mxu0 %v677
        %866 = vmatprep.subr.bf16.mxu0 0
        %867 = vmatpush1.bf16.msra.mxu0 %v678
        %868 = vmatprep.subr.bf16.mxu0 0
        %869 = vmatpush1.bf16.msra.mxu0 %v679
        %870 = vmatprep.subr.bf16.mxu0 0
        %871 = vmatpush1.bf16.msra.mxu0 %v680
        %872 = vmatprep.subr.bf16.mxu0 0
        %873 = vmatpush1.bf16.msra.mxu0 %v681
        %874 = vmatprep.subr.bf16.mxu0 0
        %875 = vmatpush1.bf16.msra.mxu0 %v682
        %876 = vmatprep.subr.bf16.mxu0 0
        %877 = vmatpush1.bf16.msra.mxu0 %v683
        %878 = vmatprep.mubr.bf16.mxu0 %v249
        %879 = vmatmul.mubr.bf16.gmra.mrb[0].mxu0 %v248
        %v880 = vpop.f32.mrb[0].mxu0
        %v881 = vadd.f32 %v840, %v880
        %v882 = vpop.f32.mrb[0].mxu0
        %v883 = vpop.f32.mrb[0].mxu0
        %v884 = vadd.f32 %v843, %v883
        %v885 = vpop.f32.mrb[0].mxu0
        %886 = vdwg.mxu0
        %887 = vmatprep.subr.bf16.mxu0 0
        %888 = vmatpush1.bf16.msra.mxu0 %v684
        %889 = vmatprep.subr.bf16.mxu0 0
        %890 = vmatpush1.bf16.msra.mxu0 %v685
        %891 = vmatprep.subr.bf16.mxu0 0
        %892 = vmatpush1.bf16.msra.mxu0 %v686
        %893 = vmatprep.subr.bf16.mxu0 0
        %894 = vmatpush1.bf16.msra.mxu0 %v687
        %895 = vmatprep.subr.bf16.mxu0 0
        %896 = vmatpush1.bf16.msra.mxu0 %v688
        %897 = vmatprep.subr.bf16.mxu0 0
        %898 = vmatpush1.bf16.msra.mxu0 %v689
        %899 = vmatprep.subr.bf16.mxu0 0
        %900 = vmatpush1.bf16.msra.mxu0 %v690
        %901 = vmatprep.subr.bf16.mxu0 0
        %902 = vmatpush1.bf16.msra.mxu0 %v691
        %903 = vmatprep.subr.bf16.mxu0 0
        %904 = vmatpush1.bf16.msra.mxu0 %v692
        %905 = vmatprep.subr.bf16.mxu0 0
        %906 = vmatpush1.bf16.msra.mxu0 %v693
        %907 = vmatprep.subr.bf16.mxu0 0
        %908 = vmatpush1.bf16.msra.mxu0 %v694
        %909 = vmatprep.subr.bf16.mxu0 0
        %910 = vmatpush1.bf16.msra.mxu0 %v695
        %911 = vmatprep.subr.bf16.mxu0 0
        %912 = vmatpush1.bf16.msra.mxu0 %v696
        %913 = vmatprep.subr.bf16.mxu0 0
        %914 = vmatpush1.bf16.msra.mxu0 %v697
        %915 = vmatprep.subr.bf16.mxu0 0
        %916 = vmatpush1.bf16.msra.mxu0 %v698
        %917 = vmatprep.subr.bf16.mxu0 0
        %918 = vmatpush1.bf16.msra.mxu0 %v699
        %919 = vmatprep.mubr.bf16.mxu0 %v251
        %920 = vmatmul.mubr.bf16.gmra.mrb[0].mxu0 %v250
        %v921 = vpop.f32.mrb[0].mxu0
        %v922 = vadd.f32 %v881, %v921
        %v923 = vpop.f32.mrb[0].mxu0
        %v924 = vpop.f32.mrb[0].mxu0
        %v925 = vadd.f32 %v884, %v924
        %v926 = vpop.f32.mrb[0].mxu0
        %927 = vdwg.mxu0
        %v928 = vadd.f32 %v226, %v922
        %v929 = vadd.f32 %v227, %v925
        %930 = vst [vmem:[#allocation2] sm:$0xff] %v928
        %931 = vst [vmem:[#allocation2 + $0x8] sm:$0xf] %v929
        %p932 = scmp.eq.s32.totalorder %s21, 1
        // Predicated region
        $region45: #{tpu_custom_call.1} parent=31 // pred_check
          %p933 = pneg %p932
        $region46: #{tpu_custom_call.1} parent=31 // pred_check_branch
          %935 = sbr.rel (%p933) target = $region48
        $region47: #{tpu_custom_call.1} parent=31 // pred_region
          %v936 = vld [vmem:[#allocation2] sm:$0xff]
          %v937 = vld [vmem:[#allocation2 + $0x8] sm:$0xf]
          %v938 = vld [vmem:[%s2] sm:$0x1]
          %v940 = vlaneseq
          %v941 = vshrl.u32 %v940, 7
          %v942 = vsub.s32 0, %v941
          %v943 = vrot.slane %v938, %v942
          %v945 = vadd.f32 %v936, %v943
          %v946 = vadd.f32 %v937, %v943
          %v947 = vmul.f32 %v945, %v945
          %v948 = vmul.f32 %v946, %v946
          %949 = vadd.xlane.f32.xlu0 %v947
          %v950 = vpop.xlane.xlu0 %949
          %vm951 = vcmask 1043456
          %v952 = vsel %vm951, %v948, 0.0
          %953 = vadd.xlane.f32.xlu0 %v952
          %v954 = vpop.xlane.xlu0 %953
          %v955 = vmax.f32 %v950, 1e-24
          %v956 = vmax.f32 %v954, 1e-24
          %v957 = vrsqrt.pop %v955
          %v958 = vrsqrt.pop %v956
          %v959 = vmul.f32 %v945, %v957
          %v960 = vmul.f32 %v946, %v958
          %961 = vst [vmem:[#allocation8] sm:$0xff] %v959
          %962 = vst [vmem:[#allocation8 + $0x8] sm:$0xf] %v960
        $region48: #{tpu_custom_call.1} parent=31 // pred_fallthru
          _
        // Predicated region
        $region49: #{tpu_custom_call.1} parent=31 // pred_check
          %p963 = pneg %p107
        $region50: #{tpu_custom_call.1} parent=31 // pred_check_branch
          %965 = sbr.rel (%p963) target = $region52
        $region51: #{tpu_custom_call.1} parent=31 // pred_region
          %s967 = ssub.s32 256, 256
          %968 = vsyncadd [#allocation5], %s967
          %s969 = sshll.u32 [#allocation8], 4
          %s970 = int_to_ptr.vmem [resolvable:$true] %s969
          %975 = dma.vmem_to_hbm [thread:$0]  %s970, 256, %s3, [#allocation5], 128, 128, 8
        $region52: #{tpu_custom_call.1} parent=31 // pred_fallthru
          _
        // Predicated region
        $region53: #{tpu_custom_call.1} parent=31 // pred_check
          %p976 = pneg %p107
        $region54: #{tpu_custom_call.1} parent=31 // pred_check_branch
          %978 = sbr.rel (%p976) target = $region56
        $region55: #{tpu_custom_call.1} parent=31 // pred_region
          %979 = dma.done [#allocation5], 256
        $region56: #{tpu_custom_call.1} parent=31 // pred_fallthru
          _
      $region32: #{tpu_custom_call.1} parent=5 // pred_fallthru
        _
      %p980 = scmp.le.s32.totalorder 2, %s16
      // Predicated region
      $region57: #{tpu_custom_call.1} parent=5 // pred_check
        %p981 = pneg %p980
      $region58: #{tpu_custom_call.1} parent=5 // pred_check_branch
        %983 = sbr.rel (%p981) target = $region60
      $region59: #{tpu_custom_call.1} parent=5 // pred_region
        %s984 = ssub.s32 %s16, 2
      $region60: #{tpu_custom_call.1} parent=5 // pred_fallthru
        _
    $region6: #{tpu_custom_call.1} parent=1 // loop_footer
      %s20 = sadd.s32 1, %s16
    $region7: #{tpu_custom_call.1} parent=1 // loop_footer_branch
      %15 = sbr.rel target = $region3
    $region8: #{tpu_custom_call.1} parent=1 // loop_exit
      _
    %985 = vsyncpa [#allocation4], 1
    %s986 = scalar_lea.sflag [#allocation4], 1
    %987 = vsyncpa %s986, 1
    %988 = vsyncpa [#allocation7], 1
    %s989 = scalar_lea.sflag [#allocation7], 1
    %990 = vsyncpa %s989, 1
    %991 = vsyncpa [#allocation5], 1
    %s992 = scalar_lea.sflag [#allocation5], 1
    %993 = vsyncpa %s992, 1

</llo_original>
